<compile_context>
chip_gen: v5e
topology: v5e:2x2
jax: 0.10.0
libtpu: 0.0.40
codegen_flags: <defaults>
</compile_context>

<pallas_src>
import functools

import jax
import jax.numpy as jnp
from jax.experimental import pallas as pl
from jax.experimental.pallas import tpu as pltpu


def _fused_mlp_kernel(*refs, n_layers, use_bf16_matmul):
    """refs = (x_ref, w1_ref, b1_ref, ..., wN_ref, bN_ref, o_ref).

    Computes y = relu(...relu(x @ W1 + b1)... @ W_{N-1} + b_{N-1}) @ W_N + b_N
    entirely in-registers; only the final result is written to o_ref.
    """
    x_ref = refs[0]
    o_ref = refs[-1]
    param_refs = refs[1:-1]

    h = x_ref[...].astype(jnp.float32)
    for i in range(n_layers):
        w = param_refs[2 * i][...]
        b = param_refs[2 * i + 1][...].astype(jnp.float32)  # (1, d_out), broadcasts
        if use_bf16_matmul:
            # bf16 MXU operands, f32 accumulate; epilogue (bias/ReLU) stays f32
            # (keeps v5e's non-bf16 VPU happy and is numerically safe).
            y = jnp.dot(
                h.astype(jnp.bfloat16),
                w.astype(jnp.bfloat16),
                preferred_element_type=jnp.float32,
            )
        else:
            y = jnp.dot(h, w.astype(jnp.float32), preferred_element_type=jnp.float32)
        y = y + b
        if i < n_layers - 1:
            # dropout (eval mode) is identity; ReLU is fused here.
            y = jnp.maximum(y, 0.0)
        h = y
    o_ref[...] = h.astype(o_ref.dtype)


def fused_mlp_forward(x, weights_t, biases, *, batch_tile=512, use_bf16_matmul=False):
    """x: (B, D_in); weights_t[i]: (D_i, D_{i+1}); biases[i]: (1, D_{i+1})."""
    B, d_in = x.shape
    n_layers = len(weights_t)
    d_out = weights_t[-1].shape[1]

    # Pick a batch tile that divides B so every block is full. Small batches run
    # as a single block; large batches get a "parallel" grid with 512-row tiles
    # (auto double-buffered, megacore-shardable on v7x).
    if B <= batch_tile:
        tb = B
    else:
        tb = batch_tile
        while B % tb != 0 and tb > 8:
            tb //= 2
        if B % tb != 0:
            tb = B
    grid = (B // tb,)

    in_specs = [pl.BlockSpec((tb, d_in), lambda i: (i, 0))]
    params = []
    for w, b in zip(weights_t, biases):
        k, n = w.shape
        in_specs.append(pl.BlockSpec((k, n), lambda i: (0, 0)))
        in_specs.append(pl.BlockSpec((1, n), lambda i: (0, 0)))
        params.append(w)
        params.append(b)
    out_specs = pl.BlockSpec((tb, d_out), lambda i: (i, 0))

    flops = 2 * B * sum(int(w.shape[0]) * int(w.shape[1]) for w in weights_t)
    param_bytes = sum(int(w.size) * w.dtype.itemsize for w in weights_t) + sum(
        int(b.size) * b.dtype.itemsize for b in biases
    )
    bytes_accessed = (
        int(x.size) * x.dtype.itemsize + param_bytes + B * d_out * x.dtype.itemsize
    )
    cost = pl.CostEstimate(
        flops=flops, transcendentals=0, bytes_accessed=bytes_accessed
    )

    kernel = functools.partial(
        _fused_mlp_kernel, n_layers=n_layers, use_bf16_matmul=use_bf16_matmul
    )

    return pl.pallas_call(
        kernel,
        out_shape=jax.ShapeDtypeStruct((B, d_out), x.dtype),
        grid=grid,
        in_specs=in_specs,
        out_specs=out_specs,
        compiler_params=pltpu.CompilerParams(dimension_semantics=("parallel",)),
        cost_estimate=cost,
    )(x, *params)


class PallasMLP:
    """Equivalent of the PyTorch MLP module (act_f=relu, dropout in eval mode)."""

    def __init__(self, dims, key, dropout=0.1, use_bf16_matmul=False):
        self.dims = tuple(dims)
        self.dropout = dropout  # inference mode -> identity
        self.weights_t = []  # list of (D_in, D_out)
        self.biases = []     # list of (1, D_out)
        for i in range(len(dims) - 1):
            key, kw, kb = jax.random.split(key, 3)
            fan_in = dims[i]
            bound = 1.0 / jnp.sqrt(jnp.float32(fan_in))
            # Matches torch.nn.Linear default init: U(-1/sqrt(fan_in), 1/sqrt(fan_in))
            w = jax.random.uniform(
                kw, (dims[i + 1], dims[i]), jnp.float32, -bound, bound
            )
            b = jax.random.uniform(kb, (dims[i + 1],), jnp.float32, -bound, bound)
            self.weights_t.append(jnp.transpose(w))        # (D_in, D_out)
            self.biases.append(b.reshape(1, dims[i + 1]))  # (1, D_out)
        # Single jitted dispatch for the whole (fused) forward pass.
        self._forward = jax.jit(
            functools.partial(fused_mlp_forward, use_bf16_matmul=use_bf16_matmul)
        )

    def __call__(self, x):
        return self._forward(x, self.weights_t, self.biases)


def reference_mlp(x, weights_t, biases):
    """Pure-JAX reference for correctness checking."""
    n = len(weights_t)
    for i in range(n):
        x = x @ weights_t[i] + biases[i]
        if i < n - 1:
            x = jnp.maximum(x, 0.0)
    return x


if __name__ == "__main__":
    key = jax.random.PRNGKey(0)
    k_params, k_x = jax.random.split(key)

    batch = 8
    dims = (32, 64, 64, 16)  # 3 Linear layers: 32->64->64->16

    mlp = PallasMLP(dims, k_params, dropout=0.1)
    x = jax.random.normal(k_x, (batch, dims[0]), jnp.float32)

    out = mlp(x)
    out = jax.block_until_ready(out)

    ref = reference_mlp(x, mlp.weights_t, mlp.biases)
    assert out.shape == (batch, dims[-1]), out.shape
    assert jnp.allclose(out, ref, atol=1e-5, rtol=1e-5), (
        "Pallas MLP output mismatch vs reference"
    )

    print("KERNEL_OK")
</pallas_src>

<mosaic_0001>
module attributes {stable_mosaic.version = 11 : i64} {
  func.func @_fused_mlp_kernel(%arg0: i32, %arg1: memref<8x32xf32, #tpu.memory_space<vmem>>, %arg2: memref<32x64xf32, #tpu.memory_space<vmem>>, %arg3: memref<1x64xf32, #tpu.memory_space<vmem>>, %arg4: memref<64x64xf32, #tpu.memory_space<vmem>>, %arg5: memref<1x64xf32, #tpu.memory_space<vmem>>, %arg6: memref<64x16xf32, #tpu.memory_space<vmem>>, %arg7: memref<1x16xf32, #tpu.memory_space<vmem>>, %arg8: memref<8x16xf32, #tpu.memory_space<vmem>>) attributes {dimension_semantics = [#tpu.dimension_semantics<parallel>], iteration_bounds = array<i64: 1>, scalar_prefetch = 0 : i64, scratch_operands = 0 : i64, tpu.core_type = #tpu.core_type<tc>, window_params = [{transform_indices = @transform_0, window_bounds = array<i64: 8, 32>}, {pipeline_mode = #tpu.pipeline_mode<synchronous>, transform_indices = @transform_1, window_bounds = array<i64: 32, 64>}, {pipeline_mode = #tpu.pipeline_mode<synchronous>, transform_indices = @transform_2, window_bounds = array<i64: 1, 64>}, {pipeline_mode = #tpu.pipeline_mode<synchronous>, transform_indices = @transform_3, window_bounds = array<i64: 64, 64>}, {pipeline_mode = #tpu.pipeline_mode<synchronous>, transform_indices = @transform_4, window_bounds = array<i64: 1, 64>}, {pipeline_mode = #tpu.pipeline_mode<synchronous>, transform_indices = @transform_5, window_bounds = array<i64: 64, 16>}, {pipeline_mode = #tpu.pipeline_mode<synchronous>, transform_indices = @transform_6, window_bounds = array<i64: 1, 16>}, {transform_indices = @transform_7, window_bounds = array<i64: 8, 16>}]} {
    %c0 = arith.constant 0 : index
    %c0_0 = arith.constant 0 : index
    %0 = vector.load %arg1[%c0, %c0_0] : memref<8x32xf32, #tpu.memory_space<vmem>>, vector<8x32xf32>
    %c0_1 = arith.constant 0 : index
    %c0_2 = arith.constant 0 : index
    %1 = vector.load %arg2[%c0_1, %c0_2] : memref<32x64xf32, #tpu.memory_space<vmem>>, vector<32x64xf32>
    %c0_3 = arith.constant 0 : index
    %c0_4 = arith.constant 0 : index
    %2 = vector.load %arg3[%c0_3, %c0_4] : memref<1x64xf32, #tpu.memory_space<vmem>>, vector<1x64xf32>
    %cst = arith.constant dense<0.000000e+00> : vector<8x64xf32>
    %3 = tpu.matmul %0, %1, %cst {dimension_numbers = #tpu.dot_dimension_numbers<[1], [0], [0], [1], [0, 0, 1, 1], [], []>} : vector<8x32xf32>, vector<32x64xf32>, vector<8x64xf32> -> vector<8x64xf32>
    %4 = vector.broadcast %2 : vector<1x64xf32> to vector<8x64xf32>
    %5 = arith.addf %3, %4 : vector<8x64xf32>
    %cst_5 = arith.constant 0.000000e+00 : f32
    %6 = vector.broadcast %cst_5 : f32 to vector<8x64xf32>
    %7 = arith.maximumf %5, %6 : vector<8x64xf32>
    %c0_6 = arith.constant 0 : index
    %c0_7 = arith.constant 0 : index
    %8 = vector.load %arg4[%c0_6, %c0_7] : memref<64x64xf32, #tpu.memory_space<vmem>>, vector<64x64xf32>
    %c0_8 = arith.constant 0 : index
    %c0_9 = arith.constant 0 : index
    %9 = vector.load %arg5[%c0_8, %c0_9] : memref<1x64xf32, #tpu.memory_space<vmem>>, vector<1x64xf32>
    %cst_10 = arith.constant dense<0.000000e+00> : vector<8x64xf32>
    %10 = tpu.matmul %7, %8, %cst_10 {dimension_numbers = #tpu.dot_dimension_numbers<[1], [0], [0], [1], [0, 0, 1, 1], [], []>} : vector<8x64xf32>, vector<64x64xf32>, vector<8x64xf32> -> vector<8x64xf32>
    %11 = vector.broadcast %9 : vector<1x64xf32> to vector<8x64xf32>
    %12 = arith.addf %10, %11 : vector<8x64xf32>
    %cst_11 = arith.constant 0.000000e+00 : f32
    %13 = vector.broadcast %cst_11 : f32 to vector<8x64xf32>
    %14 = arith.maximumf %12, %13 : vector<8x64xf32>
    %c0_12 = arith.constant 0 : index
    %c0_13 = arith.constant 0 : index
    %15 = vector.load %arg6[%c0_12, %c0_13] : memref<64x16xf32, #tpu.memory_space<vmem>>, vector<64x16xf32>
    %c0_14 = arith.constant 0 : index
    %c0_15 = arith.constant 0 : index
    %16 = vector.load %arg7[%c0_14, %c0_15] : memref<1x16xf32, #tpu.memory_space<vmem>>, vector<1x16xf32>
    %cst_16 = arith.constant dense<0.000000e+00> : vector<8x16xf32>
    %17 = tpu.matmul %14, %15, %cst_16 {dimension_numbers = #tpu.dot_dimension_numbers<[1], [0], [0], [1], [0, 0, 1, 1], [], []>} : vector<8x64xf32>, vector<64x16xf32>, vector<8x16xf32> -> vector<8x16xf32>
    %18 = vector.broadcast %16 : vector<1x16xf32> to vector<8x16xf32>
    %19 = arith.addf %17, %18 : vector<8x16xf32>
    %c0_17 = arith.constant 0 : index
    %c0_18 = arith.constant 0 : index
    %20 = vector.load %arg8[%c0_17, %c0_18] : memref<8x16xf32, #tpu.memory_space<vmem>>, vector<8x16xf32>
    tpu.vector_store %arg8[%c0_17, %c0_18], %19 {strides = array<i32>} : memref<8x16xf32, #tpu.memory_space<vmem>>, vector<8x16xf32>,
    return
  }
  func.func @transform_0(%arg0: i32) -> (i32, i32) {
    %c0_i32 = arith.constant 0 : i32
    %c0_i32_0 = arith.constant 0 : i32
    return %arg0, %c0_i32 : i32, i32
  }
  func.func @transform_1(%arg0: i32) -> (i32, i32) {
    %c0_i32 = arith.constant 0 : i32
    %c0_i32_0 = arith.constant 0 : i32
    %c0_i32_1 = arith.constant 0 : i32
    return %c0_i32, %c0_i32_0 : i32, i32
  }
  func.func @transform_2(%arg0: i32) -> (i32, i32) {
    %c0_i32 = arith.constant 0 : i32
    %c0_i32_0 = arith.constant 0 : i32
    %c0_i32_1 = arith.constant 0 : i32
    return %c0_i32, %c0_i32_0 : i32, i32
  }
  func.func @transform_3(%arg0: i32) -> (i32, i32) {
    %c0_i32 = arith.constant 0 : i32
    %c0_i32_0 = arith.constant 0 : i32
    %c0_i32_1 = arith.constant 0 : i32
    return %c0_i32, %c0_i32_0 : i32, i32
  }
  func.func @transform_4(%arg0: i32) -> (i32, i32) {
    %c0_i32 = arith.constant 0 : i32
    %c0_i32_0 = arith.constant 0 : i32
    %c0_i32_1 = arith.constant 0 : i32
    return %c0_i32, %c0_i32_0 : i32, i32
  }
  func.func @transform_5(%arg0: i32) -> (i32, i32) {
    %c0_i32 = arith.constant 0 : i32
    %c0_i32_0 = arith.constant 0 : i32
    %c0_i32_1 = arith.constant 0 : i32
    return %c0_i32, %c0_i32_0 : i32, i32
  }
  func.func @transform_6(%arg0: i32) -> (i32, i32) {
    %c0_i32 = arith.constant 0 : i32
    %c0_i32_0 = arith.constant 0 : i32
    %c0_i32_1 = arith.constant 0 : i32
    return %c0_i32, %c0_i32_0 : i32, i32
  }
  func.func @transform_7(%arg0: i32) -> (i32, i32) {
    %c0_i32 = arith.constant 0 : i32
    %c0_i32_0 = arith.constant 0 : i32
    return %arg0, %c0_i32 : i32, i32
  }
}

</mosaic_0001>

<llo_original>
// kernel: fused_mlp_forward.1
$region0: #{fused_mlp_forward.1}
  #allocation0 [shape = 'u32[]', space=smem, size = 0x4, offset = 0x4, fixed_abs, tag = 'smem constant byte address 0x4 - core index']
  #allocation1 [shape = 'u32[72,128]{1,0:T(1,128)}', space=vmem, size = 0x9000, scoped, tag = 'internal scratch']
  %s0 = inlined_call_operand.vmem [shape: f32[8,32], index: 0, kind: input, shape index: {}]
  %s1 = inlined_call_operand.hbm [shape: f32[32,64], index: 1, kind: input, shape index: {}]
  %s2 = inlined_call_operand.vmem [shape: f32[1,64], index: 2, kind: input, shape index: {}]
  %s3 = inlined_call_operand.vmem [shape: f32[64,64], index: 3, kind: input, shape index: {}]
  %s4 = inlined_call_operand.vmem [shape: f32[1,64], index: 4, kind: input, shape index: {}]
  %s5 = inlined_call_operand.vmem [shape: f32[64,16], index: 5, kind: input, shape index: {}]
  %s6 = inlined_call_operand.vmem [shape: f32[1,16], index: 6, kind: input, shape index: {}]
  %s7 = inlined_call_operand.hbm [shape: f32[8,16], index: 7, kind: output, shape index: {}]
  %s8 = sld [smem:[#allocation0]]
  $region42: #{fused_mlp_forward.1} parent=0
    _
  %s10 = ssub.s32 1, %s8
  %s11 = scalar_select 0, %s10, %s8
  $region1: #{fused_mlp_forward.1} parent=0
    #allocation2 [shape = 'u8[16384]{0}', space=vmem, size = 0x4000, scoped, tag = 'input window, operand 1, single buffered']
    #allocation3 [shape = 's32[1]{0}', space=sflag, size = 0x4, scoped, tag = 'scoped memory for fused_mlp_forward.1']
    #allocation4 [shape = 's32[1]{0}', space=sflag, size = 0x4, scoped, tag = 'scoped memory for fused_mlp_forward.1']
    #allocation5 [shape = 'u8[4096]{0}', space=vmem, size = 0x1000, scoped, tag = 'output window, operand 0, single buffered']
    %12 = vsyncpa [#allocation3], 0
    %13 = vsyncpa [#allocation4], 0
    // Predicated region
    $region2: #{fused_mlp_forward.1} parent=1 // pred_check
      _
    $region3: #{fused_mlp_forward.1} parent=1 // pred_check_branch
      %15 = sbr.rel (0) target = $region5
    $region4: #{fused_mlp_forward.1} parent=1 // pred_region
      _
    $region5: #{fused_mlp_forward.1} parent=1 // pred_fallthru
      _
    // Predicated region
    $region6: #{fused_mlp_forward.1} parent=1 // pred_check
      _
    $region7: #{fused_mlp_forward.1} parent=1 // pred_check_branch
      %17 = sbr.rel (0) target = $region9
    $region8: #{fused_mlp_forward.1} parent=1 // pred_region
      %19 = vsyncadd [#allocation3], 0
      %s20 = sshll.u32 %s1, 4
      %s21 = int_to_ptr.hbm [resolvable:$true] %s20
      %s22 = sshll.u32 [#allocation2], 4
      %s23 = int_to_ptr.vmem [resolvable:$true] %s22
      %28 = dma.hbm_to_vmem [thread:$0]  %s21, 512, %s23, [#allocation3], 128, 128, 8
    $region9: #{fused_mlp_forward.1} parent=1 // pred_fallthru
      _
    // Predicated region
    $region10: #{fused_mlp_forward.1} parent=1 // pred_check
      _
    $region11: #{fused_mlp_forward.1} parent=1 // pred_check_branch
      %30 = sbr.rel (0) target = $region13
    $region12: #{fused_mlp_forward.1} parent=1 // pred_region
      _
    $region13: #{fused_mlp_forward.1} parent=1 // pred_fallthru
      _
    // Predicated region
    $region14: #{fused_mlp_forward.1} parent=1 // pred_check
      _
    $region15: #{fused_mlp_forward.1} parent=1 // pred_check_branch
      %32 = sbr.rel (0) target = $region17
    $region16: #{fused_mlp_forward.1} parent=1 // pred_region
      _
    $region17: #{fused_mlp_forward.1} parent=1 // pred_fallthru
      _
    // Predicated region
    $region18: #{fused_mlp_forward.1} parent=1 // pred_check
      _
    $region19: #{fused_mlp_forward.1} parent=1 // pred_check_branch
      %34 = sbr.rel (0) target = $region21
    $region20: #{fused_mlp_forward.1} parent=1 // pred_region
      _
    $region21: #{fused_mlp_forward.1} parent=1 // pred_fallthru
      _
    // Predicated region
    $region22: #{fused_mlp_forward.1} parent=1 // pred_check
      _
    $region23: #{fused_mlp_forward.1} parent=1 // pred_check_branch
      %36 = sbr.rel (0) target = $region25
    $region24: #{fused_mlp_forward.1} parent=1 // pred_region
      _
    $region25: #{fused_mlp_forward.1} parent=1 // pred_fallthru
      _
    // Predicated region
    $region26: #{fused_mlp_forward.1} parent=1 // pred_check
      _
    $region27: #{fused_mlp_forward.1} parent=1 // pred_check_branch
      %38 = sbr.rel (0) target = $region29
    $region28: #{fused_mlp_forward.1} parent=1 // pred_region
      _
    $region29: #{fused_mlp_forward.1} parent=1 // pred_fallthru
      _
    // Predicated region
    $region30: #{fused_mlp_forward.1} parent=1 // pred_check
      _
    $region31: #{fused_mlp_forward.1} parent=1 // pred_check_branch
      %40 = sbr.rel (0) target = $region33
    $region32: #{fused_mlp_forward.1} parent=1 // pred_region
      %42 = dma.done [#allocation3], 512
    $region33: #{fused_mlp_forward.1} parent=1 // pred_fallthru
      _
    %v43 = vld [vmem:[%s0] sm:$0xff]
    %v44 = vld [vmem:[#allocation2] sm:$0xff]
    %v45 = vld [vmem:[#allocation2 + $0x8] sm:$0xff]
    %v46 = vld [vmem:[#allocation2 + $0x10] sm:$0xff]
    %v47 = vld [vmem:[#allocation2 + $0x18] sm:$0xff]
    %v48 = vld [vmem:[%s2] sm:$0x1]
    %v50 = vperm.slane %v48, 0
    %vm52 = vcmask 261120
    %v54 = vsel %vm52, %v43, 0
    %56 = vmatpush.msra.mxu0 0.0
    %57 = vmatpush.msra.mxu0 0.0
    %58 = vmatpush.msra.mxu0 0.0
    %59 = vmatpush.msra.mxu0 0.0
    %60 = vmatpush.msra.mxu0 0.0
    %61 = vmatpush.msra.mxu0 0.0
    %62 = vmatpush.msra.mxu0 0.0
    %63 = vmatpush.msra.mxu0 0.0
    %64 = vmatpush.msra.mxu0 0.0
    %65 = vmatpush.msra.mxu0 0.0
    %66 = vmatpush.msra.mxu0 0.0
    %67 = vmatpush.msra.mxu0 0.0
    %68 = vmatpush.msra.mxu0 %v47
    %69 = vmatpush.msra.mxu0 %v46
    %70 = vmatpush.msra.mxu0 %v45
    %71 = vmatpush.msra.mxu0 %v44
    %72 = vmatmul.f32.gmra.mxu0 %v54
    %v73 = vpop.f32.mrf.mxu0
    %v74 = vadd.f32 %v50, %v73
    %75 = vdwg.mxu0
    %v76 = vmax.f32 %v74, 0.0
    %v77 = vld [vmem:[%s3] sm:$0xff]
    %v78 = vld [vmem:[%s3 + $0x8] sm:$0xff]
    %v79 = vld [vmem:[%s3 + $0x10] sm:$0xff]
    %v80 = vld [vmem:[%s3 + $0x18] sm:$0xff]
    %v81 = vld [vmem:[%s3 + $0x20] sm:$0xff]
    %v82 = vld [vmem:[%s3 + $0x28] sm:$0xff]
    %v83 = vld [vmem:[%s3 + $0x30] sm:$0xff]
    %v84 = vld [vmem:[%s3 + $0x38] sm:$0xff]
    %v85 = vld [vmem:[%s4] sm:$0x1]
    %v87 = vperm.slane %v85, 0
    %vm89 = vcmask 523264
    %v91 = vsel %vm89, %v76, 0
    %93 = vmatpush.msra.mxu0 0.0
    %94 = vmatpush.msra.mxu0 0.0
    %95 = vmatpush.msra.mxu0 0.0
    %96 = vmatpush.msra.mxu0 0.0
    %97 = vmatpush.msra.mxu0 0.0
    %98 = vmatpush.msra.mxu0 0.0
    %99 = vmatpush.msra.mxu0 0.0
    %100 = vmatpush.msra.mxu0 0.0
    %101 = vmatpush.msra.mxu0 %v84
    %102 = vmatpush.msra.mxu0 %v83
    %103 = vmatpush.msra.mxu0 %v82
    %104 = vmatpush.msra.mxu0 %v81
    %105 = vmatpush.msra.mxu0 %v80
    %106 = vmatpush.msra.mxu0 %v79
    %107 = vmatpush.msra.mxu0 %v78
    %108 = vmatpush.msra.mxu0 %v77
    %109 = vmatmul.f32.gmra.mxu0 %v91
    %v110 = vpop.f32.mrf.mxu0
    %v111 = vadd.f32 %v87, %v110
    %112 = vdwg.mxu0
    %v113 = vmax.f32 %v111, 0.0
    %v114 = vld [vmem:[%s5] sm:$0xff]
    %v115 = vld [vmem:[%s5 + $0x8] sm:$0xff]
    %v116 = vld [vmem:[%s5 + $0x10] sm:$0xff]
    %v117 = vld [vmem:[%s5 + $0x18] sm:$0xff]
    %v118 = vld [vmem:[%s5 + $0x20] sm:$0xff]
    %v119 = vld [vmem:[%s5 + $0x28] sm:$0xff]
    %v120 = vld [vmem:[%s5 + $0x30] sm:$0xff]
    %v121 = vld [vmem:[%s5 + $0x38] sm:$0xff]
    %v122 = vld [vmem:[%s6] sm:$0x1]
    %v124 = vperm.slane %v122, 0
    %v127 = vsel %vm89, %v113, 0
    %129 = vmatpush.msra.mxu0 0.0
    %130 = vmatpush.msra.mxu0 0.0
    %131 = vmatpush.msra.mxu0 0.0
    %132 = vmatpush.msra.mxu0 0.0
    %133 = vmatpush.msra.mxu0 0.0
    %134 = vmatpush.msra.mxu0 0.0
    %135 = vmatpush.msra.mxu0 0.0
    %136 = vmatpush.msra.mxu0 0.0
    %137 = vmatpush.msra.mxu0 %v121
    %138 = vmatpush.msra.mxu0 %v120
    %139 = vmatpush.msra.mxu0 %v119
    %140 = vmatpush.msra.mxu0 %v118
    %141 = vmatpush.msra.mxu0 %v117
    %142 = vmatpush.msra.mxu0 %v116
    %143 = vmatpush.msra.mxu0 %v115
    %144 = vmatpush.msra.mxu0 %v114
    %145 = vmatmul.f32.gmra.mxu0 %v127
    %v146 = vpop.f32.mrf.mxu0
    %v147 = vadd.f32 %v124, %v146
    %148 = vdwg.mxu0
    %vm149 = vcmask 130048
    %150 = vst.msk [vmem:[#allocation5] sm:$0xff] %vm149, %v147
    // Predicated region
    $region34: #{fused_mlp_forward.1} parent=1 // pred_check
      _
    $region35: #{fused_mlp_forward.1} parent=1 // pred_check_branch
      %152 = sbr.rel (0) target = $region37
    $region36: #{fused_mlp_forward.1} parent=1 // pred_region
      %154 = vsyncadd [#allocation4], 0
      %s156 = sshll.u32 [#allocation5], 4
      %s157 = int_to_ptr.vmem [resolvable:$true] %s156
      %s158 = sshll.u32 %s7, 4
      %s159 = int_to_ptr.hbm [resolvable:$true] %s158
      %161 = dma.vmem_to_hbm [thread:$0]  %s157, 128, %s159, [#allocation4]
    $region37: #{fused_mlp_forward.1} parent=1 // pred_fallthru
      _
    // Predicated region
    $region38: #{fused_mlp_forward.1} parent=1 // pred_check
      _
    $region39: #{fused_mlp_forward.1} parent=1 // pred_check_branch
      %163 = sbr.rel (0) target = $region41
    $region40: #{fused_mlp_forward.1} parent=1 // pred_region
      %165 = dma.done [#allocation4], 128
    $region41: #{fused_mlp_forward.1} parent=1 // pred_fallthru
      _
    %166 = vsyncpa [#allocation3], 1
    %167 = vsyncpa [#allocation4], 1

</llo_original>
